<compile_context>
chip_gen: v7x
topology: tpu7x:2x2x1
jax: 0.10.0
libtpu: 0.0.40
codegen_flags: <defaults>
</compile_context>

<pallas_src>
import functools

import jax
import jax.numpy as jnp
from jax.experimental import pallas as pl
from jax.experimental.pallas import tpu as pltpu

IN_DIM = 192
OUT_DIM = 512


def _round_up(n, m):
    return ((n + m - 1) // m) * m


def linear_kernel(x_ref, w_ref, b_ref, o_ref):
    # x tile arrives as f32 (no extra wrapper HBM pass); VPU-cast to bf16 just
    # before the MXU dot. f32 accumulation, f32 bias add, cast on store.
    x_bf = x_ref[...].astype(jnp.bfloat16)
    acc = jnp.dot(x_bf, w_ref[...], preferred_element_type=jnp.float32)
    o_ref[...] = (acc + b_ref[...]).astype(o_ref.dtype)


def _choose_tile_b(B, tb):
    # Multiple of 128: clean (sub)lane packing and amortized per-step overhead.
    tile_b = min(_round_up(tb, 128), _round_up(B, 128))
    # v7x megacore: "parallel" only helps with >= 2 grid steps, so split a
    # single-tile batch in two when it's big enough (harmless on v5e/v6e).
    if B > 128 and pl.cdiv(B, tile_b) < 2:
        tile_b = max(128, _round_up(pl.cdiv(B, 2), 128))
    return tile_b


@functools.partial(jax.jit, static_argnames=("tb", "out_dtype"))
def wav2vec_classifier_forward(x, w, b, *, tb=1024, out_dtype=jnp.float32):
    """y = x @ w + b  (Wav2VecClassifier.forward == classifier Linear).

    x: (B, 192) float32
    w: (192, 512) float32  (PyTorch nn.Linear weight, pre-transposed to (in, out))
    b: (512,)    float32
    out_dtype: jnp.float32 for PyTorch parity, jnp.bfloat16 to halve the
               dominant output HBM writeback (downstream AMSoftmax tolerates it).
    returns: (B, 512) out_dtype
    """
    B = x.shape[0]
    tile_b = _choose_tile_b(B, tb)
    grid = (pl.cdiv(B, tile_b),)  # ragged tail handled by Pallas block masking

    # One-time wrapper cast of the tiny, VMEM-resident weight only.
    w_bf = w.astype(jnp.bfloat16)
    b2d = b.reshape(1, OUT_DIM).astype(jnp.float32)

    out_bytes = jnp.dtype(out_dtype).itemsize
    cost = pl.CostEstimate(
        flops=2 * B * IN_DIM * OUT_DIM,
        transcendentals=0,
        bytes_accessed=(x.size * 4 + w_bf.size * 2 + b2d.size * 4
                        + B * OUT_DIM * out_bytes),
    )

    return pl.pallas_call(
        linear_kernel,
        out_shape=jax.ShapeDtypeStruct((B, OUT_DIM), out_dtype),
        grid=grid,
        in_specs=[
            pl.BlockSpec((tile_b, IN_DIM), lambda i: (i, 0)),    # batch-tiled x (f32)
            pl.BlockSpec((IN_DIM, OUT_DIM), lambda i: (0, 0)),   # weight: VMEM-resident
            pl.BlockSpec((1, OUT_DIM), lambda i: (0, 0)),        # bias:   VMEM-resident
        ],
        out_specs=pl.BlockSpec((tile_b, OUT_DIM), lambda i: (i, 0)),
        compiler_params=pltpu.CompilerParams(
            dimension_semantics=("parallel",),  # v7x: batch tiles across 2 TCs
        ),
        cost_estimate=cost,
    )(x, w_bf, b2d)


if __name__ == "__main__":
    key = jax.random.PRNGKey(0)
    k_x, k_w, k_b = jax.random.split(key, 3)

    # Small batch, not a multiple of the tile -> exercises the masked partial
    # last block and a multi-step (2-tile) grid.
    B = 200
    x = jax.random.normal(k_x, (B, IN_DIM), dtype=jnp.float32)
    # PyTorch stores nn.Linear weight as (out, in); keep it pre-transposed (in, out).
    w = jax.random.normal(k_w, (IN_DIM, OUT_DIM), dtype=jnp.float32) * 0.02
    b = jax.random.normal(k_b, (OUT_DIM,), dtype=jnp.float32) * 0.02

    y = wav2vec_classifier_forward(x, w, b, tb=128)
    y = jax.block_until_ready(y)
    assert y.shape == (B, OUT_DIM) and y.dtype == jnp.float32

    # Reference with identical bf16 operand rounding + f32 accumulation.
    y_ref = jnp.dot(x.astype(jnp.bfloat16), w.astype(jnp.bfloat16),
                    preferred_element_type=jnp.float32) + b[None, :]
    assert jnp.allclose(y, y_ref, atol=1e-4, rtol=1e-4)

    # Loose sanity check against full-f32 math (bf16 cast error only).
    y_f32 = x @ w + b[None, :]
    assert jnp.allclose(y, y_f32, atol=5e-2, rtol=5e-2)

    # bf16-output fast path (for feeding AMSoftmax / logits downstream).
    y_bf = wav2vec_classifier_forward(x, w, b, tb=128, out_dtype=jnp.bfloat16)
    y_bf = jax.block_until_ready(y_bf)
    assert y_bf.shape == (B, OUT_DIM) and y_bf.dtype == jnp.bfloat16
    assert jnp.allclose(y_bf.astype(jnp.float32), y_ref, atol=3e-2, rtol=3e-2)

    print("KERNEL_OK")
</pallas_src>

<mosaic_0001>
module attributes {stable_mosaic.version = 11 : i64} {
  func.func @linear_kernel(%arg0: i32, %arg1: memref<128x192xf32, #tpu.memory_space<vmem>>, %arg2: memref<192x512xbf16, #tpu.memory_space<vmem>>, %arg3: memref<1x512xf32, #tpu.memory_space<vmem>>, %arg4: memref<128x512xf32, #tpu.memory_space<vmem>>) attributes {dimension_semantics = [#tpu.dimension_semantics<parallel>], iteration_bounds = array<i64: 2>, scalar_prefetch = 0 : i64, scratch_operands = 0 : i64, tpu.core_type = #tpu.core_type<tc>, window_params = [{transform_indices = @transform_0, window_bounds = array<i64: 128, 192>}, {pipeline_mode = #tpu.pipeline_mode<synchronous>, transform_indices = @transform_1, window_bounds = array<i64: 192, 512>}, {pipeline_mode = #tpu.pipeline_mode<synchronous>, transform_indices = @transform_2, window_bounds = array<i64: 1, 512>}, {transform_indices = @transform_3, window_bounds = array<i64: 128, 512>}]} {
    %c0 = arith.constant 0 : index
    %c0_0 = arith.constant 0 : index
    %0 = vector.load %arg1[%c0, %c0_0] : memref<128x192xf32, #tpu.memory_space<vmem>>, vector<128x192xf32>
    %1 = arith.truncf %0 : vector<128x192xf32> to vector<128x192xbf16>
    %c0_1 = arith.constant 0 : index
    %c0_2 = arith.constant 0 : index
    %2 = vector.load %arg2[%c0_1, %c0_2] : memref<192x512xbf16, #tpu.memory_space<vmem>>, vector<192x512xbf16>
    %cst = arith.constant dense<0.000000e+00> : vector<128x512xf32>
    %3 = tpu.matmul %1, %2, %cst {dimension_numbers = #tpu.dot_dimension_numbers<[1], [0], [0], [1], [0, 0, 1, 1], [], []>} : vector<128x192xbf16>, vector<192x512xbf16>, vector<128x512xf32> -> vector<128x512xf32>
    %c0_3 = arith.constant 0 : index
    %c0_4 = arith.constant 0 : index
    %4 = vector.load %arg3[%c0_3, %c0_4] : memref<1x512xf32, #tpu.memory_space<vmem>>, vector<1x512xf32>
    %5 = vector.broadcast %4 : vector<1x512xf32> to vector<128x512xf32>
    %6 = arith.addf %3, %5 : vector<128x512xf32>
    %c0_5 = arith.constant 0 : index
    %c0_6 = arith.constant 0 : index
    %7 = vector.load %arg4[%c0_5, %c0_6] : memref<128x512xf32, #tpu.memory_space<vmem>>, vector<128x512xf32>
    tpu.vector_store %arg4[%c0_5, %c0_6], %6 {strides = array<i32>} : memref<128x512xf32, #tpu.memory_space<vmem>>, vector<128x512xf32>,
    return
  }
  func.func @transform_0(%arg0: i32) -> (i32, i32) {
    %c0_i32 = arith.constant 0 : i32
    %c0_i32_0 = arith.constant 0 : i32
    return %arg0, %c0_i32 : i32, i32
  }
  func.func @transform_1(%arg0: i32) -> (i32, i32) {
    %c0_i32 = arith.constant 0 : i32
    %c0_i32_0 = arith.constant 0 : i32
    %c0_i32_1 = arith.constant 0 : i32
    return %c0_i32, %c0_i32_0 : i32, i32
  }
  func.func @transform_2(%arg0: i32) -> (i32, i32) {
    %c0_i32 = arith.constant 0 : i32
    %c0_i32_0 = arith.constant 0 : i32
    %c0_i32_1 = arith.constant 0 : i32
    return %c0_i32, %c0_i32_0 : i32, i32
  }
  func.func @transform_3(%arg0: i32) -> (i32, i32) {
    %c0_i32 = arith.constant 0 : i32
    %c0_i32_0 = arith.constant 0 : i32
    return %arg0, %c0_i32 : i32, i32
  }
}

</mosaic_0001>

<llo_original>
// kernel: wav2vec_classifier_forward.1
$region0: #{wav2vec_classifier_forward.1}
  #allocation0 [shape = 'u32[]', space=smem, size = 0x4, offset = 0x4, fixed_abs, tag = 'smem constant byte address 0x4 - core index']
  #allocation1 [shape = 'u32[144,128]{1,0:T(1,128)}', space=vmem, size = 0x12000, scoped, tag = 'internal scratch']
  %s0 = inlined_call_operand.vmem [shape: f32[200,192], index: 0, kind: input, shape index: {}]
  %s1 = inlined_call_operand.vmem [shape: bf16[192,512], index: 1, kind: input, shape index: {}]
  %s2 = inlined_call_operand.vmem [shape: f32[1,512], index: 2, kind: input, shape index: {}]
  %s3 = inlined_call_operand.hbm [shape: f32[200,512], index: 3, kind: output, shape index: {}]
  %s4 = sld [smem:[#allocation0]]
  $region45: #{wav2vec_classifier_forward.1} parent=0
    _
  %s6 = ssub.s32 1, %s4
  %s7 = scalar_select 0, %s6, %s4
  $region1: #{wav2vec_classifier_forward.1} parent=0
    #allocation2 [shape = 'u8[524288]{0}', space=vmem, size = 0x80000, scoped, tag = 'output window, operand 0']
    #allocation3 [shape = 's32[2]{0}', space=sflag, size = 0x8, scoped, tag = 'scoped memory for wav2vec_classifier_forward.1']
    %8 = vsyncpa [#allocation3], 0
    %s9 = scalar_lea.sflag [#allocation3], 1
    %10 = vsyncpa %s9, 0
    loop: start=0, step=1, limit=4
    $region2: #{wav2vec_classifier_forward.1} parent=1 // loop_pre_header
      _
    $region3: #{wav2vec_classifier_forward.1} parent=1 // loop_header
      %s12 = sphi 0, %s16
      %p13 = scmp.ge.s32.totalorder %s12, 4
      %s22 = sphi 0, %s24
      %s25 = sphi 0, %s22
      %s26 = sphi 0, %s25
      %s42 = sphi 0, %s26
      %s46 = sphi 0, %s46
      %s48 = sphi 0, %s46
      %s49 = sphi 0, %s48
      %s63 = sphi 0, %s49
      %s67 = sphi 0, %s67
      %s69 = sphi 0, %s67
      %s70 = sphi 0, %s69
      %s84 = sphi 0, %s70
      %s90 = sphi 0, %s92
      %s93 = sphi 0, %s90
      %s94 = sphi 0, %s93
      %s110 = sphi 0, %s94
    $region4: #{wav2vec_classifier_forward.1} parent=1 // loop_header_branch
      %15 = sbr.rel (%p13) target = $region8
    $region5: #{wav2vec_classifier_forward.1} parent=1 // loop_body
      %s17 = ssub.s32 %s12, 1
      %s18 = ssub.s32 %s12, 2
      %s19 = sadd.s32 %s12, 1
      %s20 = ssub.s32 %s12, %s19
      %p21 = scmp.eq.s32.totalorder %s20, 0
      %s23 = sadd.s32 %s22, 1
      %s24 = scalar_select %p21, %s22, %s23
      %p27 = pneg %p21
      %p28 = scmp.eq.s32.totalorder %s12, 1
      %p29 = por %p27, %p28
      %p30 = scmp.ne.s32.totalorder %s22, %s25
      %p31 = scmp.eq.s32.totalorder %s12, 0
      %p32 = por %p30, %p31
      %p33 = scmp.ne.s32.totalorder %s22, %s25
      %p34 = scmp.eq.s32.totalorder %s17, 1
      %p35 = por %p33, %p34
      %p36 = scmp.ne.s32.totalorder %s25, %s26
      %p37 = scmp.eq.s32.totalorder %s17, 0
      %p38 = por %p36, %p37
      %p39 = scmp.ne.s32.totalorder %s25, %s26
      %p40 = scmp.eq.s32.totalorder %s18, 1
      %p41 = por %p39, %p40
      %p43 = scmp.ne.s32.totalorder %s26, %s42
      %p44 = scmp.eq.s32.totalorder %s18, 0
      %p45 = por %p43, %p44
      %s47 = sadd.s32 %s46, 1
      %p50 = scmp.eq.s32.totalorder %s12, 1
      %p51 = scmp.ne.s32.totalorder %s46, %s48
      %p52 = scmp.eq.s32.totalorder %s12, 0
      %p53 = por %p51, %p52
      %p54 = scmp.ne.s32.totalorder %s46, %s48
      %p55 = scmp.eq.s32.totalorder %s17, 1
      %p56 = por %p54, %p55
      %p57 = scmp.ne.s32.totalorder %s48, %s49
      %p58 = scmp.eq.s32.totalorder %s17, 0
      %p59 = por %p57, %p58
      %p60 = scmp.ne.s32.totalorder %s48, %s49
      %p61 = scmp.eq.s32.totalorder %s18, 1
      %p62 = por %p60, %p61
      %p64 = scmp.ne.s32.totalorder %s49, %s63
      %p65 = scmp.eq.s32.totalorder %s18, 0
      %p66 = por %p64, %p65
      %s68 = sadd.s32 %s67, 1
      %p71 = scmp.eq.s32.totalorder %s12, 1
      %p72 = scmp.ne.s32.totalorder %s67, %s69
      %p73 = scmp.eq.s32.totalorder %s12, 0
      %p74 = por %p72, %p73
      %p75 = scmp.ne.s32.totalorder %s67, %s69
      %p76 = scmp.eq.s32.totalorder %s17, 1
      %p77 = por %p75, %p76
      %p78 = scmp.ne.s32.totalorder %s69, %s70
      %p79 = scmp.eq.s32.totalorder %s17, 0
      %p80 = por %p78, %p79
      %p81 = scmp.ne.s32.totalorder %s69, %s70
      %p82 = scmp.eq.s32.totalorder %s18, 1
      %p83 = por %p81, %p82
      %p85 = scmp.ne.s32.totalorder %s70, %s84
      %p86 = scmp.eq.s32.totalorder %s18, 0
      %p87 = por %p85, %p86
      %s88 = ssub.s32 %s12, %s19
      %p89 = scmp.eq.s32.totalorder %s88, 0
      %s91 = sadd.s32 %s90, 1
      %s92 = scalar_select %p89, %s90, %s91
      %p95 = pneg %p89
      %p96 = scmp.eq.s32.totalorder %s12, 1
      %p97 = por %p95, %p96
      %p98 = scmp.ne.s32.totalorder %s90, %s93
      %p99 = scmp.eq.s32.totalorder %s12, 0
      %p100 = por %p98, %p99
      %p101 = scmp.ne.s32.totalorder %s90, %s93
      %p102 = scmp.eq.s32.totalorder %s17, 1
      %p103 = por %p101, %p102
      %p104 = scmp.ne.s32.totalorder %s93, %s94
      %p105 = scmp.eq.s32.totalorder %s17, 0
      %p106 = por %p104, %p105
      %p107 = scmp.ne.s32.totalorder %s93, %s94
      %p108 = scmp.eq.s32.totalorder %s18, 1
      %p109 = por %p107, %p108
      %p111 = scmp.ne.s32.totalorder %s94, %s110
      %p112 = scmp.eq.s32.totalorder %s18, 0
      %p113 = por %p111, %p112
      %p114 = scmp.le.s32.totalorder 1, %s12
      %p115 = scmp.lt.s32.totalorder %s12, 3
      %p116 = pnand %p114, %p115
      %p117 = pneg %p116
      // Predicated region
      $region9: #{wav2vec_classifier_forward.1} parent=5 // pred_check
        _
      $region10: #{wav2vec_classifier_forward.1} parent=5 // pred_check_branch
        %119 = sbr.rel (%p116) target = $region12
      $region11: #{wav2vec_classifier_forward.1} parent=5 // pred_region
        %s120 = ssub.s32 %s12, 1
        // Predicated region
        $region13: #{wav2vec_classifier_forward.1} parent=11 // pred_check
          %p121 = pneg %p59
        $region14: #{wav2vec_classifier_forward.1} parent=11 // pred_check_branch
          %123 = sbr.rel (%p121) target = $region16
        $region15: #{wav2vec_classifier_forward.1} parent=11 // pred_region
          _
        $region16: #{wav2vec_classifier_forward.1} parent=11 // pred_fallthru
          _
        // Predicated region
        $region17: #{wav2vec_classifier_forward.1} parent=11 // pred_check
          %p124 = pneg %p80
        $region18: #{wav2vec_classifier_forward.1} parent=11 // pred_check_branch
          %126 = sbr.rel (%p124) target = $region20
        $region19: #{wav2vec_classifier_forward.1} parent=11 // pred_region
          _
        $region20: #{wav2vec_classifier_forward.1} parent=11 // pred_fallthru
          _
      $region12: #{wav2vec_classifier_forward.1} parent=5 // pred_fallthru
        _
      %p127 = scmp.lt.s32.totalorder %s12, 2
      // Predicated region
      $region21: #{wav2vec_classifier_forward.1} parent=5 // pred_check
        %p128 = pneg %p127
      $region22: #{wav2vec_classifier_forward.1} parent=5 // pred_check_branch
        %130 = sbr.rel (%p128) target = $region24
      $region23: #{wav2vec_classifier_forward.1} parent=5 // pred_region
        // Predicated region
        $region25: #{wav2vec_classifier_forward.1} parent=23 // pred_check
          %p131 = pneg %p32
        $region26: #{wav2vec_classifier_forward.1} parent=23 // pred_check_branch
          %133 = sbr.rel (%p131) target = $region28
        $region27: #{wav2vec_classifier_forward.1} parent=23 // pred_region
          %s134 = smul.u32 16, %s12
          %s135 = ssub.s32 25, %s134
          %p136 = scmp.lt.s32.totalorder %s135, 16
          %s137 = scalar_select %p136, %s135, 16
          %s138 = smul.u32 128, %s137
          %s139 = smul.u32 %s138, 2
          %p140 = scmp.lt.s32.totalorder %s134, 24
          %s141 = scalar_select %p140, %s134, 24
          %s142 = smul.addr %s141, 2
          %s143 = smul.addr %s142, 8
          %s144 = scalar_lea.vmem %s0, %s143
          %s145 = smul.u32 16, %s12
          %s146 = ssub.s32 25, %s145
          %p147 = scmp.lt.s32.totalorder %s146, 16
          %s148 = scalar_select %p147, %s146, 16
          %s149 = smul.u32 128, %s148
          %s150 = smul.u32 %s149, 2
        $region28: #{wav2vec_classifier_forward.1} parent=23 // pred_fallthru
          _
      $region24: #{wav2vec_classifier_forward.1} parent=5 // pred_fallthru
        _
      %p151 = scmp.le.s32.totalorder 1, %s12
      %p152 = scmp.lt.s32.totalorder %s12, 3
      %p153 = pnand %p151, %p152
      %p154 = pneg %p153
      // Predicated region
      $region29: #{wav2vec_classifier_forward.1} parent=5 // pred_check
        _
      $region30: #{wav2vec_classifier_forward.1} parent=5 // pred_check_branch
        %156 = sbr.rel (%p153) target = $region32
      $region31: #{wav2vec_classifier_forward.1} parent=5 // pred_region
        %s157 = ssub.s32 %s12, 1
        %s158 = smul.u32 16, %s17
        %s159 = ssub.s32 25, %s158
        %p160 = scmp.lt.s32.totalorder %s159, 16
        %s161 = scalar_select %p160, %s159, 16
        %s162 = smul.u32 128, %s161
        %s163 = smul.u32 %s162, 2
        %p164 = scmp.lt.s32.totalorder %s158, 24
        %s165 = scalar_select %p164, %s158, 24
        %s166 = smul.addr %s165, 2
        %s167 = smul.addr %s166, 8
        %s168 = scalar_lea.vmem %s0, %s167
        %p169 = pneg %p38
        %p170 = pneg %p35
        %p171 = pneg %p59
        %p172 = pneg %p56
        %p173 = pneg %p80
        %p174 = pneg %p77
        %p175 = pneg %p106
        %p176 = pneg %p103
        %s177 = sand.u32 %s93, 1
        %s178 = scalar_lea.sflag [#allocation3], %s177
        %s179 = sand.u32 %s93, 1
        %s180 = smul.addr %s179, 512
        %s181 = scalar_lea.vmem [#allocation2], %s180
        %s182 = smul.u32 16, %s17
        %s183 = ssub.s32 25, %s182
        %p184 = scmp.lt.s32.totalorder %s183, 16
        %s185 = scalar_select %p184, %s183, 16
        %s186 = smul.u32 128, %s185
        %s187 = smul.u32 %s186, 2
        %p188 = scmp.lt.s32.totalorder %s182, 24
        %s189 = scalar_select %p188, %s182, 24
        %s190 = smul.addr %s189, 2
        %s191 = smul.addr %s190, 8
        %s192 = scalar_lea.vmem %s0, %s191
        %s193 = smul.u32 16, %s17
        %s194 = ssub.s32 25, %s193
        %p195 = scmp.lt.s32.totalorder %s194, 16
        %s196 = scalar_select %p195, %s194, 16
        %s197 = smul.u32 128, %s196
        %s198 = smul.u32 %s197, 2
        %s199 = smul.u32 16, %s17
        %s200 = ssub.s32 25, %s199
        %p201 = scmp.lt.s32.totalorder %s200, 16
        %s202 = scalar_select %p201, %s200, 16
        %s203 = smul.u32 128, %s202
        %s204 = smul.u32 %s203, 4
        %v206 = vld [vmem:[%s192] sm:$0xff]
        %v207 = vld [vmem:[%s192 + $0x8] sm:$0xff]
        %v208 = vld [vmem:[%s192 + $0x10] sm:$0xff]
        %v209 = vld [vmem:[%s192 + $0x18] sm:$0xff]
        %v210 = vld [vmem:[%s192 + $0x20] sm:$0xff]
        %v211 = vld [vmem:[%s192 + $0x28] sm:$0xff]
        %v212 = vld [vmem:[%s192 + $0x30] sm:$0xff]
        %v213 = vld [vmem:[%s192 + $0x38] sm:$0xff]
        %v214 = vld [vmem:[%s192 + $0x40] sm:$0xff]
        %v215 = vld [vmem:[%s192 + $0x48] sm:$0xff]
        %v216 = vld [vmem:[%s192 + $0x50] sm:$0xff]
        %v217 = vld [vmem:[%s192 + $0x58] sm:$0xff]
        %v218 = vld [vmem:[%s192 + $0x60] sm:$0xff]
        %v219 = vld [vmem:[%s192 + $0x68] sm:$0xff]
        %v220 = vld [vmem:[%s192 + $0x70] sm:$0xff]
        %v221 = vld [vmem:[%s192 + $0x78] sm:$0xff]
        %v222 = vld [vmem:[%s192 + $0x80] sm:$0xff]
        %v223 = vld [vmem:[%s192 + $0x88] sm:$0xff]
        %v224 = vld [vmem:[%s192 + $0x90] sm:$0xff]
        %v225 = vld [vmem:[%s192 + $0x98] sm:$0xff]
        %v226 = vld [vmem:[%s192 + $0xa0] sm:$0xff]
        %v227 = vld [vmem:[%s192 + $0xa8] sm:$0xff]
        %v228 = vld [vmem:[%s192 + $0xb0] sm:$0xff]
        %v229 = vld [vmem:[%s192 + $0xb8] sm:$0xff]
        %v230 = vld [vmem:[%s192 + $0xc0] sm:$0xff]
        %v231 = vld [vmem:[%s192 + $0xc8] sm:$0xff]
        %v232 = vld [vmem:[%s192 + $0xd0] sm:$0xff]
        %v233 = vld [vmem:[%s192 + $0xd8] sm:$0xff]
        %v234 = vld [vmem:[%s192 + $0xe0] sm:$0xff]
        %v235 = vld [vmem:[%s192 + $0xe8] sm:$0xff]
        %v236 = vld [vmem:[%s192 + $0xf0] sm:$0xff]
        %v237 = vld [vmem:[%s192 + $0xf8] sm:$0xff]
        %v238 = vpack.c.bf16 %v208, %v206
        %v239 = vpack.c.bf16 %v209, %v207
        %v240 = vpack.c.bf16 %v212, %v210
        %v241 = vpack.c.bf16 %v213, %v211
        %v242 = vpack.c.bf16 %v216, %v214
        %v243 = vpack.c.bf16 %v217, %v215
        %v244 = vpack.c.bf16 %v220, %v218
        %v245 = vpack.c.bf16 %v221, %v219
        %v246 = vpack.c.bf16 %v224, %v222
        %v247 = vpack.c.bf16 %v225, %v223
        %v248 = vpack.c.bf16 %v228, %v226
        %v249 = vpack.c.bf16 %v229, %v227
        %v250 = vpack.c.bf16 %v232, %v230
        %v251 = vpack.c.bf16 %v233, %v231
        %v252 = vpack.c.bf16 %v236, %v234
        %v253 = vpack.c.bf16 %v237, %v235
        %v254 = vld [vmem:[%s1] sm:$0xff]
        %v255 = vld [vmem:[%s1 + $0x8] sm:$0xff]
        %v256 = vld [vmem:[%s1 + $0x10] sm:$0xff]
        %v257 = vld [vmem:[%s1 + $0x18] sm:$0xff]
        %v258 = vld [vmem:[%s1 + $0x20] sm:$0xff]
        %v259 = vld [vmem:[%s1 + $0x28] sm:$0xff]
        %v260 = vld [vmem:[%s1 + $0x30] sm:$0xff]
        %v261 = vld [vmem:[%s1 + $0x38] sm:$0xff]
        %v262 = vld [vmem:[%s1 + $0x40] sm:$0xff]
        %v263 = vld [vmem:[%s1 + $0x48] sm:$0xff]
        %v264 = vld [vmem:[%s1 + $0x50] sm:$0xff]
        %v265 = vld [vmem:[%s1 + $0x58] sm:$0xff]
        %v266 = vld [vmem:[%s1 + $0x60] sm:$0xff]
        %v267 = vld [vmem:[%s1 + $0x68] sm:$0xff]
        %v268 = vld [vmem:[%s1 + $0x70] sm:$0xff]
        %v269 = vld [vmem:[%s1 + $0x78] sm:$0xff]
        %v270 = vld [vmem:[%s1 + $0x80] sm:$0xff]
        %v271 = vld [vmem:[%s1 + $0x88] sm:$0xff]
        %v272 = vld [vmem:[%s1 + $0x90] sm:$0xff]
        %v273 = vld [vmem:[%s1 + $0x98] sm:$0xff]
        %v274 = vld [vmem:[%s1 + $0xa0] sm:$0xff]
        %v275 = vld [vmem:[%s1 + $0xa8] sm:$0xff]
        %v276 = vld [vmem:[%s1 + $0xb0] sm:$0xff]
        %v277 = vld [vmem:[%s1 + $0xb8] sm:$0xff]
        %v278 = vld [vmem:[%s1 + $0xc0] sm:$0xff]
        %v279 = vld [vmem:[%s1 + $0xc8] sm:$0xff]
        %v280 = vld [vmem:[%s1 + $0xd0] sm:$0xff]
        %v281 = vld [vmem:[%s1 + $0xd8] sm:$0xff]
        %v282 = vld [vmem:[%s1 + $0xe0] sm:$0xff]
        %v283 = vld [vmem:[%s1 + $0xe8] sm:$0xff]
        %v284 = vld [vmem:[%s1 + $0xf0] sm:$0xff]
        %v285 = vld [vmem:[%s1 + $0xf8] sm:$0xff]
        %v286 = vld [vmem:[%s1 + $0x100] sm:$0xff]
        %v287 = vld [vmem:[%s1 + $0x108] sm:$0xff]
        %v288 = vld [vmem:[%s1 + $0x110] sm:$0xff]
        %v289 = vld [vmem:[%s1 + $0x118] sm:$0xff]
        %v290 = vld [vmem:[%s1 + $0x120] sm:$0xff]
        %v291 = vld [vmem:[%s1 + $0x128] sm:$0xff]
        %v292 = vld [vmem:[%s1 + $0x130] sm:$0xff]
        %v293 = vld [vmem:[%s1 + $0x138] sm:$0xff]
        %v294 = vld [vmem:[%s1 + $0x140] sm:$0xff]
        %v295 = vld [vmem:[%s1 + $0x148] sm:$0xff]
        %v296 = vld [vmem:[%s1 + $0x150] sm:$0xff]
        %v297 = vld [vmem:[%s1 + $0x158] sm:$0xff]
        %v298 = vld [vmem:[%s1 + $0x160] sm:$0xff]
        %v299 = vld [vmem:[%s1 + $0x168] sm:$0xff]
        %v300 = vld [vmem:[%s1 + $0x170] sm:$0xff]
        %v301 = vld [vmem:[%s1 + $0x178] sm:$0xff]
        %v302 = vld [vmem:[%s2] sm:$0xf]
        %v304 = vlaneseq
        %v305 = vshrl.u32 %v304, 7
        %v306 = vsub.s32 0, %v305
        %v307 = vrot.slane %v302, %v306
        %v308 = vlaneseq
        %v309 = vshrl.u32 %v308, 7
        %v310 = vsub.s32 1, %v309
        %v311 = vrot.slane %v302, %v310
        %v312 = vlaneseq
        %v313 = vshrl.u32 %v312, 7
        %v314 = vsub.s32 2, %v313
        %v315 = vrot.slane %v302, %v314
        %v316 = vlaneseq
        %v317 = vshrl.u32 %v316, 7
        %v318 = vsub.s32 3, %v317
        %v319 = vrot.slane %v302, %v318
        %v372 = vunpack.c.l.b16 %v254
        %v373 = vunpack.c.h.b16 %v254
        %v374 = vunpack.c.l.b16 %v255
        %v375 = vunpack.c.h.b16 %v255
        %v376 = vunpack.c.l.b16 %v256
        %v377 = vunpack.c.h.b16 %v256
        %v378 = vunpack.c.l.b16 %v257
        %v379 = vunpack.c.h.b16 %v257
        %v380 = vunpack.c.l.b16 %v258
        %v381 = vunpack.c.h.b16 %v258
        %v382 = vunpack.c.l.b16 %v259
        %v383 = vunpack.c.h.b16 %v259
        %v384 = vunpack.c.l.b16 %v260
        %v385 = vunpack.c.h.b16 %v260
        %v386 = vunpack.c.l.b16 %v261
        %v387 = vunpack.c.h.b16 %v261
        %v388 = vunpack.c.l.b16 %v262
        %v389 = vunpack.c.h.b16 %v262
        %v390 = vunpack.c.l.b16 %v263
        %v391 = vunpack.c.h.b16 %v263
        %v392 = vunpack.c.l.b16 %v264
        %v393 = vunpack.c.h.b16 %v264
        %v394 = vunpack.c.l.b16 %v265
        %v395 = vunpack.c.h.b16 %v265
        %v396 = vunpack.c.l.b16 %v266
        %v397 = vunpack.c.h.b16 %v266
        %v398 = vunpack.c.l.b16 %v267
        %v399 = vunpack.c.h.b16 %v267
        %v400 = vunpack.c.l.b16 %v268
        %v401 = vunpack.c.h.b16 %v268
        %v402 = vunpack.c.l.b16 %v269
        %v403 = vunpack.c.h.b16 %v269
        %v404 = vunpack.c.l.b16 %v270
        %v405 = vunpack.c.h.b16 %v270
        %v406 = vunpack.c.l.b16 %v271
        %v407 = vunpack.c.h.b16 %v271
        %v408 = vunpack.c.l.b16 %v272
        %v409 = vunpack.c.h.b16 %v272
        %v410 = vunpack.c.l.b16 %v273
        %v411 = vunpack.c.h.b16 %v273
        %v412 = vunpack.c.l.b16 %v274
        %v413 = vunpack.c.h.b16 %v274
        %v414 = vunpack.c.l.b16 %v275
        %v415 = vunpack.c.h.b16 %v275
        %v416 = vunpack.c.l.b16 %v276
        %v417 = vunpack.c.h.b16 %v276
        %v418 = vunpack.c.l.b16 %v277
        %v419 = vunpack.c.h.b16 %v277
        %v420 = vunpack.c.l.b16 %v278
        %v421 = vunpack.c.h.b16 %v278
        %v422 = vunpack.c.l.b16 %v279
        %v423 = vunpack.c.h.b16 %v279
        %v424 = vunpack.c.l.b16 %v280
        %v425 = vunpack.c.h.b16 %v280
        %v426 = vunpack.c.l.b16 %v281
        %v427 = vunpack.c.h.b16 %v281
        %v428 = vunpack.c.l.b16 %v282
        %v429 = vunpack.c.h.b16 %v282
        %v430 = vunpack.c.l.b16 %v283
        %v431 = vunpack.c.h.b16 %v283
        %v432 = vunpack.c.l.b16 %v284
        %v433 = vunpack.c.h.b16 %v284
        %v434 = vunpack.c.l.b16 %v285
        %v435 = vunpack.c.h.b16 %v285
        %v436 = vunpack.c.l.b16 %v286
        %v437 = vunpack.c.h.b16 %v286
        %v438 = vunpack.c.l.b16 %v287
        %v439 = vunpack.c.h.b16 %v287
        %v440 = vunpack.c.l.b16 %v288
        %v441 = vunpack.c.h.b16 %v288
        %v442 = vunpack.c.l.b16 %v289
        %v443 = vunpack.c.h.b16 %v289
        %v444 = vunpack.c.l.b16 %v290
        %v445 = vunpack.c.h.b16 %v290
        %v446 = vunpack.c.l.b16 %v291
        %v447 = vunpack.c.h.b16 %v291
        %v448 = vunpack.c.l.b16 %v292
        %v449 = vunpack.c.h.b16 %v292
        %v450 = vunpack.c.l.b16 %v293
        %v451 = vunpack.c.h.b16 %v293
        %v452 = vunpack.c.l.b16 %v294
        %v453 = vunpack.c.h.b16 %v294
        %v454 = vunpack.c.l.b16 %v295
        %v455 = vunpack.c.h.b16 %v295
        %v456 = vunpack.c.l.b16 %v296
        %v457 = vunpack.c.h.b16 %v296
        %v458 = vunpack.c.l.b16 %v297
        %v459 = vunpack.c.h.b16 %v297
        %v460 = vunpack.c.l.b16 %v298
        %v461 = vunpack.c.h.b16 %v298
        %v462 = vunpack.c.l.b16 %v299
        %v463 = vunpack.c.h.b16 %v299
        %v464 = vunpack.c.l.b16 %v300
        %v465 = vunpack.c.h.b16 %v300
        %v466 = vunpack.c.l.b16 %v301
        %v467 = vunpack.c.h.b16 %v301
        %v468 = vpack.c.b16 %v376, %v372
        %v469 = vpack.c.b16 %v377, %v373
        %v470 = vpack.c.b16 %v378, %v374
        %v471 = vpack.c.b16 %v379, %v375
        %v472 = vpack.c.b16 %v384, %v380
        %v473 = vpack.c.b16 %v385, %v381
        %v474 = vpack.c.b16 %v386, %v382
        %v475 = vpack.c.b16 %v387, %v383
        %v476 = vpack.c.b16 %v392, %v388
        %v477 = vpack.c.b16 %v393, %v389
        %v478 = vpack.c.b16 %v394, %v390
        %v479 = vpack.c.b16 %v395, %v391
        %v480 = vpack.c.b16 %v400, %v396
        %v481 = vpack.c.b16 %v401, %v397
        %v482 = vpack.c.b16 %v402, %v398
        %v483 = vpack.c.b16 %v403, %v399
        %v484 = vpack.c.b16 %v408, %v404
        %v485 = vpack.c.b16 %v409, %v405
        %v486 = vpack.c.b16 %v410, %v406
        %v487 = vpack.c.b16 %v411, %v407
        %v488 = vpack.c.b16 %v416, %v412
        %v489 = vpack.c.b16 %v417, %v413
        %v490 = vpack.c.b16 %v418, %v414
        %v491 = vpack.c.b16 %v419, %v415
        %v492 = vpack.c.b16 %v424, %v420
        %v493 = vpack.c.b16 %v425, %v421
        %v494 = vpack.c.b16 %v426, %v422
        %v495 = vpack.c.b16 %v427, %v423
        %v496 = vpack.c.b16 %v432, %v428
        %v497 = vpack.c.b16 %v433, %v429
        %v498 = vpack.c.b16 %v434, %v430
        %v499 = vpack.c.b16 %v435, %v431
        %v500 = vpack.c.b16 %v440, %v436
        %v501 = vpack.c.b16 %v441, %v437
        %v502 = vpack.c.b16 %v442, %v438
        %v503 = vpack.c.b16 %v443, %v439
        %v504 = vpack.c.b16 %v448, %v444
        %v505 = vpack.c.b16 %v449, %v445
        %v506 = vpack.c.b16 %v450, %v446
        %v507 = vpack.c.b16 %v451, %v447
        %v508 = vpack.c.b16 %v456, %v452
        %v509 = vpack.c.b16 %v457, %v453
        %v510 = vpack.c.b16 %v458, %v454
        %v511 = vpack.c.b16 %v459, %v455
        %v512 = vpack.c.b16 %v464, %v460
        %v513 = vpack.c.b16 %v465, %v461
        %v514 = vpack.c.b16 %v466, %v462
        %v515 = vpack.c.b16 %v467, %v463
        %vm564 = vcmask 523264
        %v566 = vsel %vm564, %v239, 0
        %v569 = vsel %vm564, %v241, 0
        %v572 = vsel %vm564, %v243, 0
        %v575 = vsel %vm564, %v245, 0
        %v578 = vsel %vm564, %v247, 0
        %v581 = vsel %vm564, %v249, 0
        %v584 = vsel %vm564, %v251, 0
        %v587 = vsel %vm564, %v253, 0
        %589 = vmatprep.subr.bf16.mxu0 %v469
        %590 = vmatpush1.bf16.msra.mxu0 %v468
        %591 = vmatprep.subr.bf16.mxu0 %v473
        %592 = vmatpush1.bf16.msra.mxu0 %v472
        %593 = vmatprep.subr.bf16.mxu0 %v477
        %594 = vmatpush1.bf16.msra.mxu0 %v476
        %595 = vmatprep.subr.bf16.mxu0 %v481
        %596 = vmatpush1.bf16.msra.mxu0 %v480
        %597 = vmatprep.subr.bf16.mxu0 %v485
        %598 = vmatpush1.bf16.msra.mxu0 %v484
        %599 = vmatprep.subr.bf16.mxu0 %v489
        %600 = vmatpush1.bf16.msra.mxu0 %v488
        %601 = vmatprep.subr.bf16.mxu0 %v493
        %602 = vmatpush1.bf16.msra.mxu0 %v492
        %603 = vmatprep.subr.bf16.mxu0 %v497
        %604 = vmatpush1.bf16.msra.mxu0 %v496
        %605 = vmatprep.subr.bf16.mxu0 %v501
        %606 = vmatpush1.bf16.msra.mxu0 %v500
        %607 = vmatprep.subr.bf16.mxu0 %v505
        %608 = vmatpush1.bf16.msra.mxu0 %v504
        %609 = vmatprep.subr.bf16.mxu0 %v509
        %610 = vmatpush1.bf16.msra.mxu0 %v508
        %611 = vmatprep.subr.bf16.mxu0 %v513
        %612 = vmatpush1.bf16.msra.mxu0 %v512
        %613 = vmatprep.subr.bf16.mxu0 0
        %614 = vmatpush1.bf16.msra.mxu0 0
        %615 = vmatprep.subr.bf16.mxu0 0
        %616 = vmatpush1.bf16.msra.mxu0 0
        %617 = vmatprep.subr.bf16.mxu0 0
        %618 = vmatpush1.bf16.msra.mxu0 0
        %619 = vmatprep.subr.bf16.mxu0 0
        %620 = vmatpush1.bf16.msra.mxu0 0
        %621 = vmatprep.mubr.bf16.mxu0 %v566
        %622 = vmatmul.mubr.bf16.gmra.mrb[0].mxu0 %v238
        %v623 = vpop.f32.mrb[0].mxu0
        %v624 = vadd.f32 %v307, %v623
        %v625 = vpop.f32.mrb[0].mxu0
        %v626 = vadd.f32 %v311, %v625
        %v627 = vpop.f32.mrb[0].mxu0
        %v628 = vadd.f32 %v307, %v627
        %v629 = vpop.f32.mrb[0].mxu0
        %v630 = vadd.f32 %v311, %v629
        %631 = vmatprep.mubr.bf16.mxu0 %v569
        %632 = vmatmul.mubr.bf16.gmra.mrb[0].mxu0 %v240
        %v633 = vpop.f32.mrb[0].mxu0
        %v634 = vadd.f32 %v307, %v633
        %v635 = vpop.f32.mrb[0].mxu0
        %v636 = vadd.f32 %v311, %v635
        %v637 = vpop.f32.mrb[0].mxu0
        %v638 = vadd.f32 %v307, %v637
        %v639 = vpop.f32.mrb[0].mxu0
        %v640 = vadd.f32 %v311, %v639
        %641 = vmatprep.mubr.bf16.mxu0 %v572
        %642 = vmatmul.mubr.bf16.gmra.mrb[0].mxu0 %v242
        %v643 = vpop.f32.mrb[0].mxu0
        %v644 = vadd.f32 %v307, %v643
        %v645 = vpop.f32.mrb[0].mxu0
        %v646 = vadd.f32 %v311, %v645
        %v647 = vpop.f32.mrb[0].mxu0
        %v648 = vadd.f32 %v307, %v647
        %v649 = vpop.f32.mrb[0].mxu0
        %v650 = vadd.f32 %v311, %v649
        %651 = vmatprep.mubr.bf16.mxu0 %v575
        %652 = vmatmul.mubr.bf16.gmra.mrb[0].mxu0 %v244
        %v653 = vpop.f32.mrb[0].mxu0
        %v654 = vadd.f32 %v307, %v653
        %v655 = vpop.f32.mrb[0].mxu0
        %v656 = vadd.f32 %v311, %v655
        %v657 = vpop.f32.mrb[0].mxu0
        %v658 = vadd.f32 %v307, %v657
        %v659 = vpop.f32.mrb[0].mxu0
        %v660 = vadd.f32 %v311, %v659
        %661 = vmatprep.mubr.bf16.mxu0 %v578
        %662 = vmatmul.mubr.bf16.gmra.mrb[0].mxu0 %v246
        %v663 = vpop.f32.mrb[0].mxu0
        %v664 = vadd.f32 %v307, %v663
        %v665 = vpop.f32.mrb[0].mxu0
        %v666 = vadd.f32 %v311, %v665
        %v667 = vpop.f32.mrb[0].mxu0
        %v668 = vadd.f32 %v307, %v667
        %v669 = vpop.f32.mrb[0].mxu0
        %v670 = vadd.f32 %v311, %v669
        %671 = vmatprep.mubr.bf16.mxu0 %v581
        %672 = vmatmul.mubr.bf16.gmra.mrb[0].mxu0 %v248
        %v673 = vpop.f32.mrb[0].mxu0
        %v674 = vadd.f32 %v307, %v673
        %v675 = vpop.f32.mrb[0].mxu0
        %v676 = vadd.f32 %v311, %v675
        %v677 = vpop.f32.mrb[0].mxu0
        %v678 = vadd.f32 %v307, %v677
        %v679 = vpop.f32.mrb[0].mxu0
        %v680 = vadd.f32 %v311, %v679
        %681 = vmatprep.mubr.bf16.mxu0 %v584
        %682 = vmatmul.mubr.bf16.gmra.mrb[0].mxu0 %v250
        %v683 = vpop.f32.mrb[0].mxu0
        %v684 = vadd.f32 %v307, %v683
        %v685 = vpop.f32.mrb[0].mxu0
        %v686 = vadd.f32 %v311, %v685
        %v687 = vpop.f32.mrb[0].mxu0
        %v688 = vadd.f32 %v307, %v687
        %v689 = vpop.f32.mrb[0].mxu0
        %v690 = vadd.f32 %v311, %v689
        %691 = vmatprep.mubr.bf16.mxu0 %v587
        %692 = vmatmul.mubr.bf16.gmra.mrb[0].mxu0 %v252
        %v693 = vpop.f32.mrb[0].mxu0
        %v694 = vadd.f32 %v307, %v693
        %v695 = vpop.f32.mrb[0].mxu0
        %v696 = vadd.f32 %v311, %v695
        %v697 = vpop.f32.mrb[0].mxu0
        %v698 = vadd.f32 %v307, %v697
        %v699 = vpop.f32.mrb[0].mxu0
        %v700 = vadd.f32 %v311, %v699
        %701 = vdwg.mxu0
        %702 = vmatprep.subr.bf16.mxu0 %v471
        %703 = vmatpush1.bf16.msra.mxu0 %v470
        %704 = vmatprep.subr.bf16.mxu0 %v475
        %705 = vmatpush1.bf16.msra.mxu0 %v474
        %706 = vmatprep.subr.bf16.mxu0 %v479
        %707 = vmatpush1.bf16.msra.mxu0 %v478
        %708 = vmatprep.subr.bf16.mxu0 %v483
        %709 = vmatpush1.bf16.msra.mxu0 %v482
        %710 = vmatprep.subr.bf16.mxu0 %v487
        %711 = vmatpush1.bf16.msra.mxu0 %v486
        %712 = vmatprep.subr.bf16.mxu0 %v491
        %713 = vmatpush1.bf16.msra.mxu0 %v490
        %714 = vmatprep.subr.bf16.mxu0 %v495
        %715 = vmatpush1.bf16.msra.mxu0 %v494
        %716 = vmatprep.subr.bf16.mxu0 %v499
        %717 = vmatpush1.bf16.msra.mxu0 %v498
        %718 = vmatprep.subr.bf16.mxu0 %v503
        %719 = vmatpush1.bf16.msra.mxu0 %v502
        %720 = vmatprep.subr.bf16.mxu0 %v507
        %721 = vmatpush1.bf16.msra.mxu0 %v506
        %722 = vmatprep.subr.bf16.mxu0 %v511
        %723 = vmatpush1.bf16.msra.mxu0 %v510
        %724 = vmatprep.subr.bf16.mxu0 %v515
        %725 = vmatpush1.bf16.msra.mxu0 %v514
        %726 = vmatprep.subr.bf16.mxu0 0
        %727 = vmatpush1.bf16.msra.mxu0 0
        %728 = vmatprep.subr.bf16.mxu0 0
        %729 = vmatpush1.bf16.msra.mxu0 0
        %730 = vmatprep.subr.bf16.mxu0 0
        %731 = vmatpush1.bf16.msra.mxu0 0
        %732 = vmatprep.subr.bf16.mxu0 0
        %733 = vmatpush1.bf16.msra.mxu0 0
        %734 = vmatprep.mubr.bf16.mxu0 %v566
        %735 = vmatmul.mubr.bf16.gmra.mrb[0].mxu0 %v238
        %v736 = vpop.f32.mrb[0].mxu0
        %v737 = vadd.f32 %v315, %v736
        %v738 = vpop.f32.mrb[0].mxu0
        %v739 = vadd.f32 %v319, %v738
        %v740 = vpop.f32.mrb[0].mxu0
        %v741 = vadd.f32 %v315, %v740
        %v742 = vpop.f32.mrb[0].mxu0
        %v743 = vadd.f32 %v319, %v742
        %744 = vmatprep.mubr.bf16.mxu0 %v569
        %745 = vmatmul.mubr.bf16.gmra.mrb[0].mxu0 %v240
        %v746 = vpop.f32.mrb[0].mxu0
        %v747 = vadd.f32 %v315, %v746
        %v748 = vpop.f32.mrb[0].mxu0
        %v749 = vadd.f32 %v319, %v748
        %v750 = vpop.f32.mrb[0].mxu0
        %v751 = vadd.f32 %v315, %v750
        %v752 = vpop.f32.mrb[0].mxu0
        %v753 = vadd.f32 %v319, %v752
        %754 = vmatprep.mubr.bf16.mxu0 %v572
        %755 = vmatmul.mubr.bf16.gmra.mrb[0].mxu0 %v242
        %v756 = vpop.f32.mrb[0].mxu0
        %v757 = vadd.f32 %v315, %v756
        %v758 = vpop.f32.mrb[0].mxu0
        %v759 = vadd.f32 %v319, %v758
        %v760 = vpop.f32.mrb[0].mxu0
        %v761 = vadd.f32 %v315, %v760
        %v762 = vpop.f32.mrb[0].mxu0
        %v763 = vadd.f32 %v319, %v762
        %764 = vmatprep.mubr.bf16.mxu0 %v575
        %765 = vmatmul.mubr.bf16.gmra.mrb[0].mxu0 %v244
        %v766 = vpop.f32.mrb[0].mxu0
        %v767 = vadd.f32 %v315, %v766
        %v768 = vpop.f32.mrb[0].mxu0
        %v769 = vadd.f32 %v319, %v768
        %v770 = vpop.f32.mrb[0].mxu0
        %v771 = vadd.f32 %v315, %v770
        %v772 = vpop.f32.mrb[0].mxu0
        %v773 = vadd.f32 %v319, %v772
        %774 = vmatprep.mubr.bf16.mxu0 %v578
        %775 = vmatmul.mubr.bf16.gmra.mrb[0].mxu0 %v246
        %v776 = vpop.f32.mrb[0].mxu0
        %v777 = vadd.f32 %v315, %v776
        %v778 = vpop.f32.mrb[0].mxu0
        %v779 = vadd.f32 %v319, %v778
        %v780 = vpop.f32.mrb[0].mxu0
        %v781 = vadd.f32 %v315, %v780
        %v782 = vpop.f32.mrb[0].mxu0
        %v783 = vadd.f32 %v319, %v782
        %784 = vmatprep.mubr.bf16.mxu0 %v581
        %785 = vmatmul.mubr.bf16.gmra.mrb[0].mxu0 %v248
        %v786 = vpop.f32.mrb[0].mxu0
        %v787 = vadd.f32 %v315, %v786
        %v788 = vpop.f32.mrb[0].mxu0
        %v789 = vadd.f32 %v319, %v788
        %v790 = vpop.f32.mrb[0].mxu0
        %v791 = vadd.f32 %v315, %v790
        %v792 = vpop.f32.mrb[0].mxu0
        %v793 = vadd.f32 %v319, %v792
        %794 = vmatprep.mubr.bf16.mxu0 %v584
        %795 = vmatmul.mubr.bf16.gmra.mrb[0].mxu0 %v250
        %v796 = vpop.f32.mrb[0].mxu0
        %v797 = vadd.f32 %v315, %v796
        %v798 = vpop.f32.mrb[0].mxu0
        %v799 = vadd.f32 %v319, %v798
        %v800 = vpop.f32.mrb[0].mxu0
        %v801 = vadd.f32 %v315, %v800
        %v802 = vpop.f32.mrb[0].mxu0
        %v803 = vadd.f32 %v319, %v802
        %804 = vmatprep.mubr.bf16.mxu0 %v587
        %805 = vmatmul.mubr.bf16.gmra.mrb[0].mxu0 %v252
        %v806 = vpop.f32.mrb[0].mxu0
        %v807 = vadd.f32 %v315, %v806
        %v808 = vpop.f32.mrb[0].mxu0
        %v809 = vadd.f32 %v319, %v808
        %v810 = vpop.f32.mrb[0].mxu0
        %v811 = vadd.f32 %v315, %v810
        %v812 = vpop.f32.mrb[0].mxu0
        %v813 = vadd.f32 %v319, %v812
        %814 = vdwg.mxu0
        %815 = vst [vmem:[%s181] sm:$0xff] %v624
        %816 = vst [vmem:[%s181 + $0x8] sm:$0xff] %v626
        %817 = vst [vmem:[%s181 + $0x10] sm:$0xff] %v737
        %818 = vst [vmem:[%s181 + $0x18] sm:$0xff] %v739
        %819 = vst [vmem:[%s181 + $0x20] sm:$0xff] %v628
        %820 = vst [vmem:[%s181 + $0x28] sm:$0xff] %v630
        %821 = vst [vmem:[%s181 + $0x30] sm:$0xff] %v741
        %822 = vst [vmem:[%s181 + $0x38] sm:$0xff] %v743
        %823 = vst [vmem:[%s181 + $0x40] sm:$0xff] %v634
        %824 = vst [vmem:[%s181 + $0x48] sm:$0xff] %v636
        %825 = vst [vmem:[%s181 + $0x50] sm:$0xff] %v747
        %826 = vst [vmem:[%s181 + $0x58] sm:$0xff] %v749
        %827 = vst [vmem:[%s181 + $0x60] sm:$0xff] %v638
        %828 = vst [vmem:[%s181 + $0x68] sm:$0xff] %v640
        %829 = vst [vmem:[%s181 + $0x70] sm:$0xff] %v751
        %830 = vst [vmem:[%s181 + $0x78] sm:$0xff] %v753
        %831 = vst [vmem:[%s181 + $0x80] sm:$0xff] %v644
        %832 = vst [vmem:[%s181 + $0x88] sm:$0xff] %v646
        %833 = vst [vmem:[%s181 + $0x90] sm:$0xff] %v757
        %834 = vst [vmem:[%s181 + $0x98] sm:$0xff] %v759
        %835 = vst [vmem:[%s181 + $0xa0] sm:$0xff] %v648
        %836 = vst [vmem:[%s181 + $0xa8] sm:$0xff] %v650
        %837 = vst [vmem:[%s181 + $0xb0] sm:$0xff] %v761
        %838 = vst [vmem:[%s181 + $0xb8] sm:$0xff] %v763
        %839 = vst [vmem:[%s181 + $0xc0] sm:$0xff] %v654
        %840 = vst [vmem:[%s181 + $0xc8] sm:$0xff] %v656
        %841 = vst [vmem:[%s181 + $0xd0] sm:$0xff] %v767
        %842 = vst [vmem:[%s181 + $0xd8] sm:$0xff] %v769
        %843 = vst [vmem:[%s181 + $0xe0] sm:$0xff] %v658
        %844 = vst [vmem:[%s181 + $0xe8] sm:$0xff] %v660
        %845 = vst [vmem:[%s181 + $0xf0] sm:$0xff] %v771
        %846 = vst [vmem:[%s181 + $0xf8] sm:$0xff] %v773
        %847 = vst [vmem:[%s181 + $0x100] sm:$0xff] %v664
        %848 = vst [vmem:[%s181 + $0x108] sm:$0xff] %v666
        %849 = vst [vmem:[%s181 + $0x110] sm:$0xff] %v777
        %850 = vst [vmem:[%s181 + $0x118] sm:$0xff] %v779
        %851 = vst [vmem:[%s181 + $0x120] sm:$0xff] %v668
        %852 = vst [vmem:[%s181 + $0x128] sm:$0xff] %v670
        %853 = vst [vmem:[%s181 + $0x130] sm:$0xff] %v781
        %854 = vst [vmem:[%s181 + $0x138] sm:$0xff] %v783
        %855 = vst [vmem:[%s181 + $0x140] sm:$0xff] %v674
        %856 = vst [vmem:[%s181 + $0x148] sm:$0xff] %v676
        %857 = vst [vmem:[%s181 + $0x150] sm:$0xff] %v787
        %858 = vst [vmem:[%s181 + $0x158] sm:$0xff] %v789
        %859 = vst [vmem:[%s181 + $0x160] sm:$0xff] %v678
        %860 = vst [vmem:[%s181 + $0x168] sm:$0xff] %v680
        %861 = vst [vmem:[%s181 + $0x170] sm:$0xff] %v791
        %862 = vst [vmem:[%s181 + $0x178] sm:$0xff] %v793
        %863 = vst [vmem:[%s181 + $0x180] sm:$0xff] %v684
        %864 = vst [vmem:[%s181 + $0x188] sm:$0xff] %v686
        %865 = vst [vmem:[%s181 + $0x190] sm:$0xff] %v797
        %866 = vst [vmem:[%s181 + $0x198] sm:$0xff] %v799
        %867 = vst [vmem:[%s181 + $0x1a0] sm:$0xff] %v688
        %868 = vst [vmem:[%s181 + $0x1a8] sm:$0xff] %v690
        %869 = vst [vmem:[%s181 + $0x1b0] sm:$0xff] %v801
        %870 = vst [vmem:[%s181 + $0x1b8] sm:$0xff] %v803
        %871 = vst [vmem:[%s181 + $0x1c0] sm:$0xff] %v694
        %872 = vst [vmem:[%s181 + $0x1c8] sm:$0xff] %v696
        %873 = vst [vmem:[%s181 + $0x1d0] sm:$0xff] %v807
        %874 = vst [vmem:[%s181 + $0x1d8] sm:$0xff] %v809
        %875 = vst [vmem:[%s181 + $0x1e0] sm:$0xff] %v698
        %876 = vst [vmem:[%s181 + $0x1e8] sm:$0xff] %v700
        %877 = vst [vmem:[%s181 + $0x1f0] sm:$0xff] %v811
        %878 = vst [vmem:[%s181 + $0x1f8] sm:$0xff] %v813
        %s879 = sand.u32 %s93, 1
        %s880 = scalar_lea.sflag [#allocation3], %s879
        %s881 = sand.u32 %s93, 1
        %s882 = smul.addr %s881, 512
        %s883 = scalar_lea.vmem [#allocation2], %s882
        // Predicated region
        $region33: #{wav2vec_classifier_forward.1} parent=31 // pred_check
          %p884 = pneg %p103
        $region34: #{wav2vec_classifier_forward.1} parent=31 // pred_check_branch
          %886 = sbr.rel (%p884) target = $region36
        $region35: #{wav2vec_classifier_forward.1} parent=31 // pred_region
          %s887 = smul.u32 16, %s17
          %s888 = ssub.s32 25, %s887
          %p889 = scmp.lt.s32.totalorder %s888, 16
          %s890 = scalar_select %p889, %s888, 16
          %s891 = smul.u32 128, %s890
          %s892 = smul.u32 %s891, 4
          %s894 = ssub.s32 8192, %s892
          %895 = vsyncadd %s880, %s894
          %p896 = scmp.ne.s32.totalorder 0, %s892
          %s897 = smul.addr %s887, 4
          %s898 = smul.addr %s897, 128
          %s899 = scalar_lea.hbm %s3, %s898
          %s900 = smul.u32 32, %s890
          %s901 = sshll.u32 %s883, 4
          %s902 = int_to_ptr.vmem [resolvable:$true] %s901
          %s903 = sshll.u32 %s900, 4
          %907 = dma.vmem_to_hbm [thread:$0]  (%p896), %s902, %s903, %s899, %s880, 512, 512, 32
        $region36: #{wav2vec_classifier_forward.1} parent=31 // pred_fallthru
          _
      $region32: #{wav2vec_classifier_forward.1} parent=5 // pred_fallthru
        _
      %p908 = scmp.le.s32.totalorder 2, %s12
      // Predicated region
      $region37: #{wav2vec_classifier_forward.1} parent=5 // pred_check
        %p909 = pneg %p908
      $region38: #{wav2vec_classifier_forward.1} parent=5 // pred_check_branch
        %911 = sbr.rel (%p909) target = $region40
      $region39: #{wav2vec_classifier_forward.1} parent=5 // pred_region
        %s912 = ssub.s32 %s12, 2
        // Predicated region
        $region41: #{wav2vec_classifier_forward.1} parent=39 // pred_check
          %p913 = pneg %p109
        $region42: #{wav2vec_classifier_forward.1} parent=39 // pred_check_branch
          %915 = sbr.rel (%p913) target = $region44
        $region43: #{wav2vec_classifier_forward.1} parent=39 // pred_region
          %s916 = sand.u32 %s94, 1
          %s917 = scalar_lea.sflag [#allocation3], %s916
          %s918 = sand.u32 %s94, 1
          %s919 = smul.addr %s918, 512
          %s920 = scalar_lea.vmem [#allocation2], %s919
          %921 = dma.done %s917, 8192
        $region44: #{wav2vec_classifier_forward.1} parent=39 // pred_fallthru
          _
      $region40: #{wav2vec_classifier_forward.1} parent=5 // pred_fallthru
        _
    $region6: #{wav2vec_classifier_forward.1} parent=1 // loop_footer
      %s16 = sadd.s32 1, %s12
    $region7: #{wav2vec_classifier_forward.1} parent=1 // loop_footer_branch
      %11 = sbr.rel target = $region3
    $region8: #{wav2vec_classifier_forward.1} parent=1 // loop_exit
      _
    %922 = vsyncpa [#allocation3], 1
    %s923 = scalar_lea.sflag [#allocation3], 1
    %924 = vsyncpa %s923, 1

</llo_original>
